<compile_context>
chip_gen: v5e
topology: v5e:2x2
jax: 0.10.0
libtpu: 0.0.40
codegen_flags: <defaults>
</compile_context>

<pallas_src>
import functools
import math

import jax
import jax.numpy as jnp
from jax import lax
from jax.experimental import pallas as pl
from jax.experimental.pallas import tpu as pltpu


# ------------------------------ helpers --------------------------------------

def _fit_tile(dim, target, align):
    """Largest tile <= target that divides `dim` and is a multiple of `align`.

    Falls back to `dim` itself (a full-extent block is always layout-legal)."""
    if dim <= target:
        return dim
    t = (target // align) * align
    while t >= align:
        if dim % t == 0:
            return t
        t -= align
    return dim


@functools.lru_cache(maxsize=1)
def _vmem_limit():
    """~half of physical VMEM (32 MiB on v7x, 64 MiB on v5e/v6e), capped."""
    cap = 128 * 1024 * 1024
    try:
        info = pltpu.get_tpu_info()
        cap = int(getattr(info, "vmem_capacity_bytes", cap)) or cap
    except Exception:
        pass
    return max(32 * 1024 * 1024, min(cap // 2, 96 * 1024 * 1024))


# --------------------------- tiled batched linear ----------------------------

def _linear_kernel_noreduce(x_ref, w_ref, b_ref, o_ref):
    # K fits a single block: no accumulator scratch, no reduction axis.
    o_ref[0] = (
        jnp.dot(x_ref[0], w_ref[0], preferred_element_type=jnp.float32)
        + b_ref[0].astype(jnp.float32)
    ).astype(o_ref.dtype)


def _linear_kernel_reduce(x_ref, w_ref, b_ref, o_ref, acc_ref):
    # grid = (M-tiles, N-tiles, P, K-tiles); K (reduction) is the last axis.
    k = pl.program_id(3)

    @pl.when(k == 0)
    def _():
        acc_ref[...] = jnp.zeros_like(acc_ref)

    acc_ref[...] += jnp.dot(
        x_ref[0], w_ref[0], preferred_element_type=jnp.float32
    )

    @pl.when(k == pl.num_programs(3) - 1)
    def _():
        o_ref[0] = (acc_ref[...] + b_ref[0].astype(jnp.float32)).astype(o_ref.dtype)


def pallas_batched_linear(x, w, b, *, out_dtype, tm=512, tn=512, tk=512):
    """x: (P, M, K), w: (P, K, N), b: (P, 1, N)  ->  (P, M, N) = x @ w + b per P."""
    P, M, K = x.shape
    N = w.shape[2]
    tm = _fit_tile(M, tm, 8)
    tn = _fit_tile(N, tn, 128)
    tk = _fit_tile(K, tk, 128)
    vmem = _vmem_limit()

    if K <= tk:
        # No K-reduction axis needed -> fully parallel grid, no scratch.
        grid = (M // tm, N // tn, P)
        return pl.pallas_call(
            _linear_kernel_noreduce,
            out_shape=jax.ShapeDtypeStruct((P, M, N), out_dtype),
            grid_spec=pltpu.PrefetchScalarGridSpec(
                num_scalar_prefetch=0,
                grid=grid,
                in_specs=[
                    pl.BlockSpec((1, tm, K), lambda i, j, p: (p, i, 0)),
                    pl.BlockSpec((1, K, tn), lambda i, j, p: (p, 0, j)),
                    pl.BlockSpec((1, 1, tn), lambda i, j, p: (p, 0, j)),
                ],
                out_specs=pl.BlockSpec((1, tm, tn), lambda i, j, p: (p, i, j)),
            ),
            compiler_params=pltpu.CompilerParams(
                dimension_semantics=("parallel", "parallel", "parallel"),
                vmem_limit_bytes=vmem,
            ),
        )(x, w, b)

    grid = (M // tm, N // tn, P, K // tk)
    return pl.pallas_call(
        _linear_kernel_reduce,
        out_shape=jax.ShapeDtypeStruct((P, M, N), out_dtype),
        grid_spec=pltpu.PrefetchScalarGridSpec(
            num_scalar_prefetch=0,
            grid=grid,
            in_specs=[
                pl.BlockSpec((1, tm, tk), lambda i, j, p, k: (p, i, k)),
                pl.BlockSpec((1, tk, tn), lambda i, j, p, k: (p, k, j)),
                pl.BlockSpec((1, 1, tn), lambda i, j, p, k: (p, 0, j)),
            ],
            out_specs=pl.BlockSpec((1, tm, tn), lambda i, j, p, k: (p, i, j)),
            scratch_shapes=[pltpu.VMEM((tm, tn), jnp.float32)],
        ),
        compiler_params=pltpu.CompilerParams(
            dimension_semantics=("parallel", "parallel", "parallel", "arbitrary"),
            vmem_limit_bytes=vmem,
        ),
    )(x, w, b)


# ---------------------- flash-style lane-dense attention ---------------------

def _mha_flash_kernel(q_ref, k_ref, v_ref, o_ref, m_ref, l_ref, acc_ref,
                      *, n_heads, head_dim):
    # q block: (1, tq, H*Dh); k/v blocks: (1, tkv, H*Dh); heads packed along
    # lanes. grid = (B, q-tiles, kv-tiles); kv is the ("arbitrary") reduction
    # axis with online-softmax state in VMEM scratch.
    kv = pl.program_id(2)

    @pl.when(kv == 0)
    def _():
        m_ref[...] = jnp.full_like(m_ref, -jnp.inf)
        l_ref[...] = jnp.zeros_like(l_ref)
        acc_ref[...] = jnp.zeros_like(acc_ref)

    q = q_ref[0]                      # 1/sqrt(head_dim) already folded into Q proj
    k = k_ref[0]
    v = v_ref[0]

    for h in range(n_heads):          # static unrolled loop over lane slices
        sl = slice(h * head_dim, (h + 1) * head_dim)
        qh, kh, vh = q[:, sl], k[:, sl], v[:, sl]

        # scores = qh @ kh^T  (bf16 in, f32 accumulate on the MXU)
        s = lax.dot_general(
            qh, kh, (((1,), (1,)), ((), ())), preferred_element_type=jnp.float32
        )                                                         # (tq, tkv)

        m_prev = m_ref[h]                                         # (tq, 1)
        m_new = jnp.maximum(m_prev, jnp.max(s, axis=-1, keepdims=True))
        alpha = jnp.exp(m_prev - m_new)
        p = jnp.exp(s - m_new)                                    # unnormalized

        l_ref[h] = alpha * l_ref[h] + jnp.sum(p, axis=-1, keepdims=True)
        acc_ref[:, sl] = alpha * acc_ref[:, sl] + jnp.dot(
            p.astype(vh.dtype), vh, preferred_element_type=jnp.float32
        )
        m_ref[h] = m_new

    @pl.when(kv == pl.num_programs(2) - 1)
    def _():
        # Normalize AFTER the PV accumulation (tq*Dh multiplies per head) and
        # emit one lane-dense (tq, H*Dh) store (no masked partial stores).
        outs = []
        for h in range(n_heads):
            sl = slice(h * head_dim, (h + 1) * head_dim)
            inv = pl.reciprocal(l_ref[h], approx=False)           # (tq, 1)
            outs.append(acc_ref[:, sl] * inv)
        o_ref[0] = jnp.concatenate(outs, axis=-1).astype(o_ref.dtype)


def pallas_attention(q, k, v, *, n_heads, head_dim, tq=256, tkv=512):
    """q, k, v: (B, S, n_heads*head_dim) bf16 -> (B, S, n_heads*head_dim) bf16."""
    B, S, HD = q.shape
    assert HD == n_heads * head_dim
    tq = _fit_tile(S, tq, 8)
    tkv = _fit_tile(S, tkv, 8)
    grid = (B, S // tq, S // tkv)
    kernel = functools.partial(_mha_flash_kernel, n_heads=n_heads, head_dim=head_dim)

    return pl.pallas_call(
        kernel,
        out_shape=jax.ShapeDtypeStruct((B, S, HD), q.dtype),
        grid_spec=pltpu.PrefetchScalarGridSpec(
            num_scalar_prefetch=0,
            grid=grid,
            in_specs=[
                pl.BlockSpec((1, tq, HD), lambda b, i, j: (b, i, 0)),
                pl.BlockSpec((1, tkv, HD), lambda b, i, j: (b, j, 0)),
                pl.BlockSpec((1, tkv, HD), lambda b, i, j: (b, j, 0)),
            ],
            out_specs=pl.BlockSpec((1, tq, HD), lambda b, i, j: (b, i, 0)),
            scratch_shapes=[
                pltpu.VMEM((n_heads, tq, 1), jnp.float32),   # running max m
                pltpu.VMEM((n_heads, tq, 1), jnp.float32),   # running denom l
                pltpu.VMEM((tq, HD), jnp.float32),           # lane-dense acc
            ],
        ),
        compiler_params=pltpu.CompilerParams(
            dimension_semantics=("parallel", "parallel", "arbitrary"),
            vmem_limit_bytes=_vmem_limit(),
        ),
    )(q, k, v)


# ------------------------------ module wrapper --------------------------------

def init_params(key, d_model, n_heads):
    """PyTorch-style init: U(-1/sqrt(fan_in), 1/sqrt(fan_in)); weights stored
    (in_features, out_features)."""
    ks = jax.random.split(key, 8)

    def lin(kw, kb, fan_in, fan_out):
        bound = 1.0 / math.sqrt(fan_in)
        w = jax.random.uniform(kw, (fan_in, fan_out), jnp.float32, -bound, bound)
        b = jax.random.uniform(kb, (fan_out,), jnp.float32, -bound, bound)
        return w, b

    wq, bq = lin(ks[0], ks[1], d_model, d_model * n_heads)
    wk, bk = lin(ks[2], ks[3], d_model, d_model * n_heads)
    wv, bv = lin(ks[4], ks[5], d_model, d_model * n_heads)
    wo, bo = lin(ks[6], ks[7], n_heads * d_model, d_model)
    return dict(wq=wq, bq=bq, wk=wk, bk=bk, wv=wv, bv=bv, wo=wo, bo=bo)


def prepare_params(params, *, d_model, n_heads):
    """One-time weight prep hoisted out of the forward path: fold the
    1/sqrt(head_dim) attention scale into the Q projection, stack QKV weights
    on a leading 'projection' axis, and cast to bf16 for the MXU."""
    head_dim = d_model
    scale = 1.0 / math.sqrt(head_dim)
    w_qkv = jnp.stack(
        [params["wq"] * scale, params["wk"], params["wv"]], 0
    ).astype(jnp.bfloat16)                                         # (3, d_model, H*Dh)
    b_qkv = jnp.stack(
        [params["bq"] * scale, params["bk"], params["bv"]], 0
    )[:, None, :].astype(jnp.float32)                              # (3, 1, H*Dh)
    wo = params["wo"].astype(jnp.bfloat16)[None]                   # (1, H*Dh, d_model)
    bo = params["bo"].astype(jnp.float32)[None, None, :]           # (1, 1, d_model)
    return dict(w_qkv=w_qkv, b_qkv=b_qkv, wo=wo, bo=bo)


def multi_head_attention(Q, K, V, prepared, *, d_model, n_heads, mask=None):
    """Q, K, V: (B, S, d_model) float32 -> (B, S, d_model) float32."""
    # TODO(synk): `mask` (masked_fill with -inf) not implemented; forward path uses None.
    B, S, _ = Q.shape
    head_dim = d_model                      # reference splits H*d_model into H heads
    HD = n_heads * head_dim

    # Fused QKV projection: the three activations share one tiled pallas_call
    # (leading "projection" axis P=3). Weights/biases were prepared once.
    x_qkv = jnp.stack(
        [Q.reshape(B * S, d_model), K.reshape(B * S, d_model), V.reshape(B * S, d_model)],
        0,
    ).astype(jnp.bfloat16)

    qkv = pallas_batched_linear(
        x_qkv, prepared["w_qkv"], prepared["b_qkv"], out_dtype=jnp.bfloat16
    )                                                      # (3, B*S, H*Dh)

    q = qkv[0].reshape(B, S, HD)
    k = qkv[1].reshape(B, S, HD)
    v = qkv[2].reshape(B, S, HD)

    # Flash-style attention on the lane-dense layout (heads along lanes).
    attn = pallas_attention(q, k, v, n_heads=n_heads, head_dim=head_dim)

    # Output projection, fed directly by the lane-dense slab (no transpose).
    out = pallas_batched_linear(
        attn.reshape(1, B * S, HD), prepared["wo"], prepared["bo"], out_dtype=jnp.float32
    )                                                      # (1, B*S, d_model)
    return out[0].reshape(B, S, d_model)


# ------------------------------ pure-JAX reference ----------------------------

def reference_mha(Q, K, V, params, *, d_model, n_heads):
    B, S, _ = Q.shape
    Dh = d_model

    def proj(x, w, b):
        y = x @ w + b
        return y.reshape(B, S, n_heads, Dh).transpose(0, 2, 1, 3)

    q = proj(Q, params["wq"], params["bq"])
    k = proj(K, params["wk"], params["bk"])
    v = proj(V, params["wv"], params["bv"])
    s = jnp.einsum("bhqd,bhkd->bhqk", q, k) / math.sqrt(Dh)
    p = jax.nn.softmax(s, axis=-1)
    o = jnp.einsum("bhqk,bhkd->bhqd", p, v)
    o = o.transpose(0, 2, 1, 3).reshape(B, S, n_heads * Dh)
    return o @ params["wo"] + params["bo"]


# ----------------------------------- main --------------------------------------

if __name__ == "__main__":
    d_model = 32
    n_heads = 4
    batch = 2
    seq = 8

    key = jax.random.PRNGKey(0)
    kp, kq, kk, kv = jax.random.split(key, 4)

    params = init_params(kp, d_model, n_heads)
    prepared = prepare_params(params, d_model=d_model, n_heads=n_heads)

    Q = jax.random.normal(kq, (batch, seq, d_model), jnp.float32)
    K = jax.random.normal(kk, (batch, seq, d_model), jnp.float32)
    V = jax.random.normal(kv, (batch, seq, d_model), jnp.float32)

    out = multi_head_attention(Q, K, V, prepared, d_model=d_model, n_heads=n_heads)
    out = jax.block_until_ready(out)

    assert out.shape == (batch, seq, d_model), out.shape
    assert jnp.all(jnp.isfinite(out))

    ref = reference_mha(Q, K, V, params, d_model=d_model, n_heads=n_heads)
    assert jnp.allclose(out, ref, atol=5e-2, rtol=5e-2), float(jnp.max(jnp.abs(out - ref)))

    print("KERNEL_OK")
</pallas_src>

<mosaic_0001>
module attributes {stable_mosaic.version = 11 : i64} {
  func.func @_linear_kernel_noreduce(%arg0: i32, %arg1: i32, %arg2: i32, %arg3: memref<1x16x32xbf16, #tpu.memory_space<vmem>>, %arg4: memref<1x32x128xbf16, #tpu.memory_space<vmem>>, %arg5: memref<1x1x128xf32, #tpu.memory_space<vmem>>, %arg6: memref<1x16x128xbf16, #tpu.memory_space<vmem>>) attributes {dimension_semantics = [#tpu.dimension_semantics<parallel>, #tpu.dimension_semantics<parallel>, #tpu.dimension_semantics<parallel>], iteration_bounds = array<i64: 1, 1, 3>, scalar_prefetch = 0 : i64, scratch_operands = 0 : i64, tpu.core_type = #tpu.core_type<tc>, window_params = [{transform_indices = @transform_0, window_bounds = array<i64: 1, 16, 32>}, {transform_indices = @transform_1, window_bounds = array<i64: 1, 32, 128>}, {transform_indices = @transform_2, window_bounds = array<i64: 1, 1, 128>}, {transform_indices = @transform_3, window_bounds = array<i64: 1, 16, 128>}]} {
    %c0 = arith.constant 0 : index
    %c0_0 = arith.constant 0 : index
    %c0_1 = arith.constant 0 : index
    %0 = vector.load %arg3[%c0, %c0_0, %c0_1] : memref<1x16x32xbf16, #tpu.memory_space<vmem>>, vector<1x16x32xbf16>
    %1 = vector.shape_cast %0 : vector<1x16x32xbf16> to vector<16x32xbf16>
    %c0_2 = arith.constant 0 : index
    %c0_3 = arith.constant 0 : index
    %c0_4 = arith.constant 0 : index
    %2 = vector.load %arg4[%c0_2, %c0_3, %c0_4] : memref<1x32x128xbf16, #tpu.memory_space<vmem>>, vector<1x32x128xbf16>
    %3 = vector.shape_cast %2 : vector<1x32x128xbf16> to vector<32x128xbf16>
    %cst = arith.constant dense<0.000000e+00> : vector<16x128xf32>
    %4 = tpu.matmul %1, %3, %cst {dimension_numbers = #tpu.dot_dimension_numbers<[1], [0], [0], [1], [0, 0, 1, 1], [], []>} : vector<16x32xbf16>, vector<32x128xbf16>, vector<16x128xf32> -> vector<16x128xf32>
    %c0_5 = arith.constant 0 : index
    %c0_6 = arith.constant 0 : index
    %c0_7 = arith.constant 0 : index
    %5 = vector.load %arg5[%c0_5, %c0_6, %c0_7] : memref<1x1x128xf32, #tpu.memory_space<vmem>>, vector<1x1x128xf32>
    %6 = vector.shape_cast %5 : vector<1x1x128xf32> to vector<1x128xf32>
    %7 = vector.broadcast %6 : vector<1x128xf32> to vector<16x128xf32>
    %8 = arith.addf %4, %7 : vector<16x128xf32>
    %9 = arith.truncf %8 : vector<16x128xf32> to vector<16x128xbf16>
    %c0_8 = arith.constant 0 : index
    %c0_9 = arith.constant 0 : index
    %c0_10 = arith.constant 0 : index
    %10 = vector.load %arg6[%c0_8, %c0_9, %c0_10] : memref<1x16x128xbf16, #tpu.memory_space<vmem>>, vector<1x16x128xbf16>
    %11 = vector.shape_cast %10 : vector<1x16x128xbf16> to vector<16x128xbf16>
    %12 = vector.shape_cast %9 : vector<16x128xbf16> to vector<1x16x128xbf16>
    tpu.vector_store %arg6[%c0_8, %c0_9, %c0_10], %12 {strides = array<i32>} : memref<1x16x128xbf16, #tpu.memory_space<vmem>>, vector<1x16x128xbf16>,
    return
  }
  func.func @transform_0(%arg0: i32, %arg1: i32, %arg2: i32) -> (i32, i32, i32) {
    %c0_i32 = arith.constant 0 : i32
    %c0_i32_0 = arith.constant 0 : i32
    return %arg2, %arg0, %c0_i32 : i32, i32, i32
  }
  func.func @transform_1(%arg0: i32, %arg1: i32, %arg2: i32) -> (i32, i32, i32) {
    %c0_i32 = arith.constant 0 : i32
    %c0_i32_0 = arith.constant 0 : i32
    return %arg2, %c0_i32, %arg1 : i32, i32, i32
  }
  func.func @transform_2(%arg0: i32, %arg1: i32, %arg2: i32) -> (i32, i32, i32) {
    %c0_i32 = arith.constant 0 : i32
    %c0_i32_0 = arith.constant 0 : i32
    return %arg2, %c0_i32, %arg1 : i32, i32, i32
  }
  func.func @transform_3(%arg0: i32, %arg1: i32, %arg2: i32) -> (i32, i32, i32) {
    %c0_i32 = arith.constant 0 : i32
    return %arg2, %arg0, %arg1 : i32, i32, i32
  }
}

</mosaic_0001>

<llo_original>
// kernel: tpu_custom_call.1
$region0: #{tpu_custom_call.1}
  #allocation0 [shape = 'u32[]', space=smem, size = 0x4, offset = 0x4, fixed_abs, tag = 'smem constant byte address 0x4 - core index']
  #allocation1 [shape = 'u32[72,128]{1,0:T(1,128)}', space=vmem, size = 0x9000, scoped, tag = 'internal scratch']
  %s0 = inlined_call_operand.hbm [shape: bf16[3,16,32], index: 0, kind: input, shape index: {}]
  %s1 = inlined_call_operand.hbm [shape: bf16[3,32,128], index: 1, kind: input, shape index: {}]
  %s2 = inlined_call_operand.hbm [shape: f32[3,1,128], index: 2, kind: input, shape index: {}]
  %s3 = inlined_call_operand.hbm [shape: bf16[3,16,128], index: 3, kind: output, shape index: {}]
  %s4 = sld [smem:[#allocation0]]
  $region57: #{tpu_custom_call.1} parent=0
    _
  %s6 = ssub.s32 1, %s4
  %s7 = scalar_select 0, %s6, %s4
  $region1: #{tpu_custom_call.1} parent=0
    #allocation2 [shape = 'u8[8192]{0}', space=vmem, size = 0x2000, scoped, tag = 'input window, operand 0']
    #allocation3 [shape = 's32[2]{0}', space=sflag, size = 0x8, scoped, tag = 'scoped memory for tpu_custom_call.1']
    #allocation4 [shape = 's32[2]{0}', space=sflag, size = 0x8, scoped, tag = 'scoped memory for tpu_custom_call.1']
    #allocation5 [shape = 'u8[16384]{0}', space=vmem, size = 0x4000, scoped, tag = 'input window, operand 1']
    #allocation6 [shape = 's32[2]{0}', space=sflag, size = 0x8, scoped, tag = 'scoped memory for tpu_custom_call.1']
    #allocation7 [shape = 'u8[1024]{0}', space=vmem, size = 0x400, scoped, tag = 'input window, operand 2']
    #allocation8 [shape = 'u8[8192]{0}', space=vmem, size = 0x2000, scoped, tag = 'output window, operand 0']
    %8 = vsyncpa [#allocation3], 0
    %s9 = scalar_lea.sflag [#allocation3], 1
    %10 = vsyncpa %s9, 0
    %11 = vsyncpa [#allocation6], 0
    %s12 = scalar_lea.sflag [#allocation6], 1
    %13 = vsyncpa %s12, 0
    %14 = vsyncpa [#allocation4], 0
    %s15 = scalar_lea.sflag [#allocation4], 1
    %16 = vsyncpa %s15, 0
    loop: start=0, step=1, limit=5
    $region2: #{tpu_custom_call.1} parent=1 // loop_pre_header
      _
    $region3: #{tpu_custom_call.1} parent=1 // loop_header
      %s18 = sphi 0, %s22
      %p19 = scmp.ge.s32.totalorder %s18, 5
      %s25 = sphi 0, %s44
      %s26 = sphi 0, %s40
      %s27 = sphi 0, %s36
      %s28 = sphi 0, %s25
      %s29 = sphi 0, %s26
      %s30 = sphi 0, %s27
      %s31 = sphi 0, %s28
      %s32 = sphi 0, %s29
      %s33 = sphi 0, %s30
      %s49 = sphi 0, %s51
      %s52 = sphi 0, %s49
      %s53 = sphi 0, %s52
      %s69 = sphi 0, %s53
      %s77 = sphi 0, %s79
      %s80 = sphi 0, %s77
      %s81 = sphi 0, %s80
      %s97 = sphi 0, %s81
      %s105 = sphi 0, %s107
      %s108 = sphi 0, %s105
      %s109 = sphi 0, %s108
      %s125 = sphi 0, %s109
      %s135 = sphi 0, %s137
      %s138 = sphi 0, %s135
      %s139 = sphi 0, %s138
      %s155 = sphi 0, %s139
    $region4: #{tpu_custom_call.1} parent=1 // loop_header_branch
      %21 = sbr.rel (%p19) target = $region8
    $region5: #{tpu_custom_call.1} parent=1 // loop_body
      %s23 = ssub.s32 %s18, 1
      %s24 = ssub.s32 %s18, 2
      %s34 = sadd.s32 1, %s27
      %p35 = scmp.ge.s32.totalorder %s34, 3
      %s36 = scalar_select %p35, 0, %s34
      %s37 = sadd.s32 1, %s26
      %s38 = scalar_select %p35, %s37, %s26
      %p39 = scmp.ge.s32.totalorder %s38, 1
      %s40 = scalar_select %p39, 0, %s38
      %s41 = sadd.s32 1, %s25
      %s42 = scalar_select %p39, %s41, %s25
      %p43 = scmp.ge.s32.totalorder %s42, 1
      %s44 = scalar_select %p43, 0, %s42
      %s45 = ssub.s32 %s27, %s36
      %s46 = ssub.s32 %s25, %s44
      %s47 = sor.u32 %s45, %s46
      %p48 = scmp.eq.s32.totalorder %s47, 0
      %s50 = sadd.s32 %s49, 1
      %s51 = scalar_select %p48, %s49, %s50
      %p54 = pneg %p48
      %p55 = scmp.eq.s32.totalorder %s18, 2
      %p56 = por %p54, %p55
      %p57 = scmp.ne.s32.totalorder %s49, %s52
      %p58 = scmp.eq.s32.totalorder %s18, 0
      %p59 = por %p57, %p58
      %p60 = scmp.ne.s32.totalorder %s49, %s52
      %p61 = scmp.eq.s32.totalorder %s23, 2
      %p62 = por %p60, %p61
      %p63 = scmp.ne.s32.totalorder %s52, %s53
      %p64 = scmp.eq.s32.totalorder %s23, 0
      %p65 = por %p63, %p64
      %p66 = scmp.ne.s32.totalorder %s52, %s53
      %p67 = scmp.eq.s32.totalorder %s24, 2
      %p68 = por %p66, %p67
      %p70 = scmp.ne.s32.totalorder %s53, %s69
      %p71 = scmp.eq.s32.totalorder %s24, 0
      %p72 = por %p70, %p71
      %s73 = ssub.s32 %s27, %s36
      %s74 = ssub.s32 %s26, %s40
      %s75 = sor.u32 %s73, %s74
      %p76 = scmp.eq.s32.totalorder %s75, 0
      %s78 = sadd.s32 %s77, 1
      %s79 = scalar_select %p76, %s77, %s78
      %p82 = pneg %p76
      %p83 = scmp.eq.s32.totalorder %s18, 2
      %p84 = por %p82, %p83
      %p85 = scmp.ne.s32.totalorder %s77, %s80
      %p86 = scmp.eq.s32.totalorder %s18, 0
      %p87 = por %p85, %p86
      %p88 = scmp.ne.s32.totalorder %s77, %s80
      %p89 = scmp.eq.s32.totalorder %s23, 2
      %p90 = por %p88, %p89
      %p91 = scmp.ne.s32.totalorder %s80, %s81
      %p92 = scmp.eq.s32.totalorder %s23, 0
      %p93 = por %p91, %p92
      %p94 = scmp.ne.s32.totalorder %s80, %s81
      %p95 = scmp.eq.s32.totalorder %s24, 2
      %p96 = por %p94, %p95
      %p98 = scmp.ne.s32.totalorder %s81, %s97
      %p99 = scmp.eq.s32.totalorder %s24, 0
      %p100 = por %p98, %p99
      %s101 = ssub.s32 %s27, %s36
      %s102 = ssub.s32 %s26, %s40
      %s103 = sor.u32 %s101, %s102
      %p104 = scmp.eq.s32.totalorder %s103, 0
      %s106 = sadd.s32 %s105, 1
      %s107 = scalar_select %p104, %s105, %s106
      %p110 = pneg %p104
      %p111 = scmp.eq.s32.totalorder %s18, 2
      %p112 = por %p110, %p111
      %p113 = scmp.ne.s32.totalorder %s105, %s108
      %p114 = scmp.eq.s32.totalorder %s18, 0
      %p115 = por %p113, %p114
      %p116 = scmp.ne.s32.totalorder %s105, %s108
      %p117 = scmp.eq.s32.totalorder %s23, 2
      %p118 = por %p116, %p117
      %p119 = scmp.ne.s32.totalorder %s108, %s109
      %p120 = scmp.eq.s32.totalorder %s23, 0
      %p121 = por %p119, %p120
      %p122 = scmp.ne.s32.totalorder %s108, %s109
      %p123 = scmp.eq.s32.totalorder %s24, 2
      %p124 = por %p122, %p123
      %p126 = scmp.ne.s32.totalorder %s109, %s125
      %p127 = scmp.eq.s32.totalorder %s24, 0
      %p128 = por %p126, %p127
      %s129 = ssub.s32 %s27, %s36
      %s130 = ssub.s32 %s25, %s44
      %s131 = sor.u32 %s129, %s130
      %s132 = ssub.s32 %s26, %s40
      %s133 = sor.u32 %s131, %s132
      %p134 = scmp.eq.s32.totalorder %s133, 0
      %s136 = sadd.s32 %s135, 1
      %s137 = scalar_select %p134, %s135, %s136
      %p140 = pneg %p134
      %p141 = scmp.eq.s32.totalorder %s18, 2
      %p142 = por %p140, %p141
      %p143 = scmp.ne.s32.totalorder %s135, %s138
      %p144 = scmp.eq.s32.totalorder %s18, 0
      %p145 = por %p143, %p144
      %p146 = scmp.ne.s32.totalorder %s135, %s138
      %p147 = scmp.eq.s32.totalorder %s23, 2
      %p148 = por %p146, %p147
      %p149 = scmp.ne.s32.totalorder %s138, %s139
      %p150 = scmp.eq.s32.totalorder %s23, 0
      %p151 = por %p149, %p150
      %p152 = scmp.ne.s32.totalorder %s138, %s139
      %p153 = scmp.eq.s32.totalorder %s24, 2
      %p154 = por %p152, %p153
      %p156 = scmp.ne.s32.totalorder %s139, %s155
      %p157 = scmp.eq.s32.totalorder %s24, 0
      %p158 = por %p156, %p157
      %p159 = scmp.le.s32.totalorder 1, %s18
      %p160 = scmp.lt.s32.totalorder %s18, 4
      %p161 = pnand %p159, %p160
      %p162 = pneg %p161
      // Predicated region
      $region9: #{tpu_custom_call.1} parent=5 // pred_check
        _
      $region10: #{tpu_custom_call.1} parent=5 // pred_check_branch
        %164 = sbr.rel (%p161) target = $region12
      $region11: #{tpu_custom_call.1} parent=5 // pred_region
        %s165 = ssub.s32 %s18, 1
      $region12: #{tpu_custom_call.1} parent=5 // pred_fallthru
        _
      %p166 = scmp.lt.s32.totalorder %s18, 3
      // Predicated region
      $region13: #{tpu_custom_call.1} parent=5 // pred_check
        %p167 = pneg %p166
      $region14: #{tpu_custom_call.1} parent=5 // pred_check_branch
        %169 = sbr.rel (%p167) target = $region16
      $region15: #{tpu_custom_call.1} parent=5 // pred_region
        // Predicated region
        $region17: #{tpu_custom_call.1} parent=15 // pred_check
          %p170 = pneg %p59
        $region18: #{tpu_custom_call.1} parent=15 // pred_check_branch
          %172 = sbr.rel (%p170) target = $region20
        $region19: #{tpu_custom_call.1} parent=15 // pred_region
          %s173 = sand.u32 %s49, 1
          %s174 = scalar_lea.sflag [#allocation3], %s173
          %s175 = sand.u32 %s49, 1
          %s176 = smul.addr %s175, 8
          %s177 = scalar_lea.vmem [#allocation2], %s176
          %s178 = smul.u32 2, %s25
          %180 = vsyncadd %s174, 0
          %s181 = smul.addr %s27, 2
          %s182 = sadd.s32 %s178, %s181
          %s183 = smul.addr %s182, 4
          %s184 = scalar_lea.hbm %s0, %s183
          %s185 = sshll.u32 %s184, 4
          %s186 = int_to_ptr.hbm [resolvable:$true] %s185
          %s187 = sshll.u32 %s177, 4
          %s188 = int_to_ptr.vmem [resolvable:$true] %s187
          %193 = dma.hbm_to_vmem [thread:$0]  %s186, 128, %s188, %s174, 64, 64, 4
        $region20: #{tpu_custom_call.1} parent=15 // pred_fallthru
          _
        // Predicated region
        $region21: #{tpu_custom_call.1} parent=15 // pred_check
          %p194 = pneg %p87
        $region22: #{tpu_custom_call.1} parent=15 // pred_check_branch
          %196 = sbr.rel (%p194) target = $region24
        $region23: #{tpu_custom_call.1} parent=15 // pred_region
          %s197 = sand.u32 %s18, 1
          %s198 = scalar_lea.sflag [#allocation6], %s197
          %s199 = sand.u32 %s77, 1
          %s200 = smul.addr %s199, 16
          %s201 = scalar_lea.vmem [#allocation5], %s200
          %203 = vsyncadd %s198, 0
          %s204 = smul.addr %s27, 4
          %s205 = sadd.s32 %s26, %s204
          %s206 = smul.addr %s205, 4
          %s207 = scalar_lea.hbm %s1, %s206
          %s208 = sshll.u32 %s207, 4
          %s209 = int_to_ptr.hbm [resolvable:$true] %s208
          %s210 = sshll.u32 %s201, 4
          %s211 = int_to_ptr.vmem [resolvable:$true] %s210
          %216 = dma.hbm_to_vmem [thread:$0]  %s209, 256, %s211, %s198, 64, 64, 4
        $region24: #{tpu_custom_call.1} parent=15 // pred_fallthru
          _
        // Predicated region
        $region25: #{tpu_custom_call.1} parent=15 // pred_check
          %p217 = pneg %p115
        $region26: #{tpu_custom_call.1} parent=15 // pred_check_branch
          %219 = sbr.rel (%p217) target = $region28
        $region27: #{tpu_custom_call.1} parent=15 // pred_region
          %s220 = sand.u32 %s18, 1
          %s221 = scalar_lea.sflag [#allocation6], %s220
          %s222 = sand.u32 %s105, 1
          %s223 = scalar_lea.vmem [#allocation7], %s222
          %225 = vsyncadd %s221, 0
          %s226 = sadd.s32 %s26, %s27
          %s227 = scalar_lea.hbm %s2, %s226
          %s229 = sshll.u32 %s227, 4
          %s230 = int_to_ptr.hbm [resolvable:$true] %s229
          %s231 = sshll.u32 %s223, 4
          %s232 = int_to_ptr.vmem [resolvable:$true] %s231
          %234 = dma.hbm_to_vmem [thread:$0]  %s230, 16, %s232, %s221
        $region28: #{tpu_custom_call.1} parent=15 // pred_fallthru
          _
      $region16: #{tpu_custom_call.1} parent=5 // pred_fallthru
        _
      %p235 = scmp.le.s32.totalorder 1, %s18
      %p236 = scmp.lt.s32.totalorder %s18, 4
      %p237 = pnand %p235, %p236
      %p238 = pneg %p237
      // Predicated region
      $region29: #{tpu_custom_call.1} parent=5 // pred_check
        _
      $region30: #{tpu_custom_call.1} parent=5 // pred_check_branch
        %240 = sbr.rel (%p237) target = $region32
      $region31: #{tpu_custom_call.1} parent=5 // pred_region
        %s241 = ssub.s32 %s18, 1
        %s242 = sand.u32 %s52, 1
        %s243 = scalar_lea.sflag [#allocation3], %s242
        %s244 = sand.u32 %s52, 1
        %s245 = smul.addr %s244, 8
        %s246 = scalar_lea.vmem [#allocation2], %s245
        // Predicated region
        $region33: #{tpu_custom_call.1} parent=31 // pred_check
          %p247 = pneg %p65
        $region34: #{tpu_custom_call.1} parent=31 // pred_check_branch
          %249 = sbr.rel (%p247) target = $region36
        $region35: #{tpu_custom_call.1} parent=31 // pred_region
          %251 = dma.done %s243, 128
        $region36: #{tpu_custom_call.1} parent=31 // pred_fallthru
          _
        %s252 = sand.u32 %s23, 1
        %s253 = scalar_lea.sflag [#allocation6], %s252
        %s254 = sand.u32 %s80, 1
        %s255 = smul.addr %s254, 16
        %s256 = scalar_lea.vmem [#allocation5], %s255
        // Predicated region
        $region37: #{tpu_custom_call.1} parent=31 // pred_check
          %p257 = pneg %p93
        $region38: #{tpu_custom_call.1} parent=31 // pred_check_branch
          %259 = sbr.rel (%p257) target = $region40
        $region39: #{tpu_custom_call.1} parent=31 // pred_region
          %261 = dma.done %s253, 256
        $region40: #{tpu_custom_call.1} parent=31 // pred_fallthru
          _
        %s262 = sand.u32 %s23, 1
        %s263 = scalar_lea.sflag [#allocation6], %s262
        %s264 = sand.u32 %s108, 1
        %s265 = scalar_lea.vmem [#allocation7], %s264
        // Predicated region
        $region41: #{tpu_custom_call.1} parent=31 // pred_check
          %p266 = pneg %p121
        $region42: #{tpu_custom_call.1} parent=31 // pred_check_branch
          %268 = sbr.rel (%p266) target = $region44
        $region43: #{tpu_custom_call.1} parent=31 // pred_region
          %270 = dma.done %s263, 16
        $region44: #{tpu_custom_call.1} parent=31 // pred_fallthru
          _
        %s271 = sand.u32 %s52, 1
        %s272 = scalar_lea.sflag [#allocation3], %s271
        %s273 = sand.u32 %s52, 1
        %s274 = smul.addr %s273, 8
        %s275 = scalar_lea.vmem [#allocation2], %s274
        %p276 = pneg %p65
        %p277 = pneg %p62
        %s278 = sand.u32 %s23, 1
        %s279 = scalar_lea.sflag [#allocation6], %s278
        %s280 = sand.u32 %s80, 1
        %s281 = smul.addr %s280, 16
        %s282 = scalar_lea.vmem [#allocation5], %s281
        %p283 = pneg %p93
        %p284 = pneg %p90
        %s285 = sand.u32 %s23, 1
        %s286 = scalar_lea.sflag [#allocation6], %s285
        %s287 = sand.u32 %s108, 1
        %s288 = scalar_lea.vmem [#allocation7], %s287
        %p289 = pneg %p121
        %p290 = pneg %p118
        %p291 = pneg %p151
        %p292 = pneg %p148
        %s293 = sand.u32 %s138, 1
        %s294 = scalar_lea.sflag [#allocation4], %s293
        %s295 = sand.u32 %s138, 1
        %s296 = smul.addr %s295, 8
        %s297 = scalar_lea.vmem [#allocation8], %s296
        %s298 = smul.u32 2, %s28
        %s299 = smul.u32 2, %s28
        %v301 = vld [vmem:[%s246] sm:$0xf]
        %v302 = vld [vmem:[%s246 + $0x4] sm:$0xf]
        %v303 = vld [vmem:[%s256] sm:$0xf]
        %v304 = vld [vmem:[%s256 + $0x4] sm:$0xf]
        %v305 = vld [vmem:[%s256 + $0x8] sm:$0xf]
        %v306 = vld [vmem:[%s256 + $0xc] sm:$0xf]
        %v307 = vld [vmem:[%s265] sm:$0x1]
        %v309 = vperm.slane %v307, 0
        %v313 = vunpack.c.l.b16 %v301
        %v314 = vunpack.c.l.b16 %v302
        %v315 = vpack.c.b16 %v314, %v313
        %v320 = vunpack.c.l.b16 %v303
        %v321 = vunpack.c.l.b16 %v304
        %v322 = vunpack.c.l.b16 %v305
        %v323 = vunpack.c.l.b16 %v306
        %v324 = vpack.c.b16 %v321, %v320
        %v325 = vpack.c.b16 %v323, %v322
        %vm328 = vcmask 261120
        %v330 = vsel %vm328, %v315, 0
        %332 = vmatpush.bf16.msra.mxu0 0
        %333 = vmatpush.bf16.msra.mxu0 0
        %334 = vmatpush.bf16.msra.mxu0 0
        %335 = vmatpush.bf16.msra.mxu0 0
        %336 = vmatpush.bf16.msra.mxu0 0
        %337 = vmatpush.bf16.msra.mxu0 0
        %338 = vmatpush.bf16.msra.mxu0 %v325
        %339 = vmatpush.bf16.msra.mxu0 %v324
        %340 = vmatmul.bf16.gmra.mxu0 %v330
        %v341 = vpop.f32.mrf.mxu0
        %v342 = vadd.f32 %v309, %v341
        %v343 = vpop.f32.mrf.mxu0
        %v344 = vadd.f32 %v309, %v343
        %345 = vdwg.mxu0
        %v346 = vpack.c.bf16 %v342, %v342
        %v347 = vpack.c.bf16 %v344, %v344
        %348 = vst [vmem:[%s297] sm:$0xf] %v346
        %349 = vst [vmem:[%s297 + $0x4] sm:$0xf] %v347
        %s350 = sand.u32 %s138, 1
        %s351 = scalar_lea.sflag [#allocation4], %s350
        %s352 = sand.u32 %s138, 1
        %s353 = smul.addr %s352, 8
        %s354 = scalar_lea.vmem [#allocation8], %s353
        // Predicated region
        $region45: #{tpu_custom_call.1} parent=31 // pred_check
          %p355 = pneg %p148
        $region46: #{tpu_custom_call.1} parent=31 // pred_check_branch
          %357 = sbr.rel (%p355) target = $region48
        $region47: #{tpu_custom_call.1} parent=31 // pred_region
          %s358 = smul.u32 2, %s28
          %360 = vsyncadd %s351, 0
          %s361 = sadd.s32 %s29, %s358
          %s362 = smul.addr %s30, 2
          %s363 = sadd.s32 %s361, %s362
          %s364 = smul.addr %s363, 4
          %s365 = scalar_lea.hbm %s3, %s364
          %s366 = sshll.u32 %s354, 4
          %s367 = int_to_ptr.vmem [resolvable:$true] %s366
          %s368 = sshll.u32 %s365, 4
          %s369 = int_to_ptr.hbm [resolvable:$true] %s368
          %374 = dma.vmem_to_hbm [thread:$0]  %s367, 128, %s369, %s351, 64, 64, 4
        $region48: #{tpu_custom_call.1} parent=31 // pred_fallthru
          _
      $region32: #{tpu_custom_call.1} parent=5 // pred_fallthru
        _
      %p375 = scmp.le.s32.totalorder 2, %s18
      // Predicated region
      $region49: #{tpu_custom_call.1} parent=5 // pred_check
        %p376 = pneg %p375
      $region50: #{tpu_custom_call.1} parent=5 // pred_check_branch
        %378 = sbr.rel (%p376) target = $region52
      $region51: #{tpu_custom_call.1} parent=5 // pred_region
        %s379 = ssub.s32 %s18, 2
        // Predicated region
        $region53: #{tpu_custom_call.1} parent=51 // pred_check
          %p380 = pneg %p154
        $region54: #{tpu_custom_call.1} parent=51 // pred_check_branch
          %382 = sbr.rel (%p380) target = $region56
        $region55: #{tpu_custom_call.1} parent=51 // pred_region
          %s383 = sand.u32 %s139, 1
          %s384 = scalar_lea.sflag [#allocation4], %s383
          %s385 = sand.u32 %s139, 1
          %s386 = smul.addr %s385, 8
          %s387 = scalar_lea.vmem [#allocation8], %s386
          %389 = dma.done %s384, 128
        $region56: #{tpu_custom_call.1} parent=51 // pred_fallthru
          _
      $region52: #{tpu_custom_call.1} parent=5 // pred_fallthru
        _
    $region6: #{tpu_custom_call.1} parent=1 // loop_footer
      %s22 = sadd.s32 1, %s18
    $region7: #{tpu_custom_call.1} parent=1 // loop_footer_branch
      %17 = sbr.rel target = $region3
    $region8: #{tpu_custom_call.1} parent=1 // loop_exit
      _
    %390 = vsyncpa [#allocation3], 1
    %s391 = scalar_lea.sflag [#allocation3], 1
    %392 = vsyncpa %s391, 1
    %393 = vsyncpa [#allocation6], 1
    %s394 = scalar_lea.sflag [#allocation6], 1
    %395 = vsyncpa %s394, 1
    %396 = vsyncpa [#allocation4], 1
    %s397 = scalar_lea.sflag [#allocation4], 1
    %398 = vsyncpa %s397, 1

</llo_original>
